<compile_context>
chip_gen: v5e
topology: v5e:2x2
jax: 0.10.0
libtpu: 0.0.40
codegen_flags: <defaults>
</compile_context>

<pallas_src>
import jax
import jax.numpy as jnp
from jax import lax
from jax.experimental import pallas as pl
from jax.experimental.pallas import tpu as pltpu

_LANES = 128  # points per output row (lane width)


def plane_kernel(c_ref, sel_ref, x_ref, out_ref):
    # c_ref   : SMEM (1,)        f32  -- dot(offset, normalized normal)
    # sel_ref : VMEM (384, 128)  f32  -- de-interleave matrix carrying the normal
    # x_ref   : VMEM (TR, 384)   f32  -- TR rows of 128 interleaved xyz points
    # out_ref : VMEM (TR, 128)   f32
    out_ref[...] = (
        jnp.dot(
            x_ref[...],
            sel_ref[...],
            preferred_element_type=jnp.float32,
            precision=lax.Precision.HIGHEST,  # keep f32 accuracy on the MXU
        )
        - c_ref[0]
    )


def plane_forward(x, normal, offset, *, block_rows=4096):
    """x: (B, N, 3); normal, offset: (1, 1, 3) -> (B, N) f32."""
    B, N, C = x.shape
    assert C == 3
    x = x.astype(jnp.float32)

    # Parameter glue: normal <- normal / ||normal||;
    # ((x - offset) * n).sum(-1) == x.n - offset.n
    n_vec = normal.reshape(3).astype(jnp.float32)
    n_vec = n_vec / jnp.linalg.norm(n_vec)
    c = jnp.dot(offset.reshape(3).astype(jnp.float32), n_vec).reshape(1)

    # Selection matrix: sel[3*j + ch, j] = n[ch]
    sel = (
        jnp.eye(_LANES, dtype=jnp.float32)[:, None, :] * n_vec[None, :, None]
    ).reshape(3 * _LANES, _LANES)

    M = B * N
    rows = pl.cdiv(M, _LANES)
    m_pad = rows * _LANES
    x_flat = x.reshape(-1)
    if m_pad != M:
        # Only hit when B*N is not a multiple of 128 (one extra HBM pass).
        x_flat = jnp.pad(x_flat, (0, (m_pad - M) * 3))
    # Free bitcast view: row r = 128 consecutive interleaved xyz points.
    x_view = x_flat.reshape(rows, 3 * _LANES)

    tr = min(block_rows, rows)  # full-dim block for small inputs
    grid = (pl.cdiv(rows, tr),)

    out = pl.pallas_call(
        plane_kernel,
        out_shape=jax.ShapeDtypeStruct((rows, _LANES), jnp.float32),
        grid=grid,
        in_specs=[
            pl.BlockSpec(memory_space=pltpu.MemorySpace.SMEM),      # c (1,)
            pl.BlockSpec((3 * _LANES, _LANES), lambda i: (0, 0)),   # sel (resident)
            pl.BlockSpec((tr, 3 * _LANES), lambda i: (i, 0)),       # x tile
        ],
        out_specs=pl.BlockSpec((tr, _LANES), lambda i: (i, 0)),
        compiler_params=pltpu.CompilerParams(
            dimension_semantics=("parallel",),      # megacore sharding on v7x
            vmem_limit_bytes=32 * 1024 * 1024,      # raises v5e's 16 MiB default
        ),
    )(c, sel, x_view)

    return out.reshape(-1)[:M].reshape(B, N)


if __name__ == "__main__":
    # Deterministic parameter init, matching the module's __init__ (all ones).
    normal = jnp.ones((1, 1, 3), dtype=jnp.float32)
    offset = jnp.ones((1, 1, 3), dtype=jnp.float32)

    key = jax.random.PRNGKey(0)
    B, N = 2, 2048
    x = jax.random.normal(key, (B, N, 3), dtype=jnp.float32)

    # Default config (single large block).
    out = plane_forward(x, normal, offset)
    out = jax.block_until_ready(out)
    # Multi-step grid path (exercises the pipelined tiling).
    out_tiled = plane_forward(x, normal, offset, block_rows=8)
    out_tiled = jax.block_until_ready(out_tiled)

    # Pure-JAX reference of the PyTorch forward.
    normal_n = normal / jnp.linalg.norm(normal)
    ref = ((x - offset) * normal_n).sum(-1)

    assert out.shape == (B, N), out.shape
    err0 = float(jnp.max(jnp.abs(out - ref)))
    err1 = float(jnp.max(jnp.abs(out_tiled - ref)))
    assert jnp.allclose(out, ref, atol=5e-5, rtol=1e-4), err0
    assert jnp.allclose(out_tiled, ref, atol=5e-5, rtol=1e-4), err1
    print("KERNEL_OK")
</pallas_src>

<mosaic_0001>
module attributes {stable_mosaic.version = 11 : i64} {
  func.func @plane_kernel(%arg0: i32, %arg1: memref<1xf32, #tpu.memory_space<smem>>, %arg2: memref<384x128xf32, #tpu.memory_space<vmem>>, %arg3: memref<32x384xf32, #tpu.memory_space<vmem>>, %arg4: memref<32x128xf32, #tpu.memory_space<vmem>>) attributes {dimension_semantics = [#tpu.dimension_semantics<parallel>], iteration_bounds = array<i64: 1>, scalar_prefetch = 0 : i64, scratch_operands = 0 : i64, tpu.core_type = #tpu.core_type<tc>, window_params = [{transform_indices = @transform_0, window_bounds = array<i64: 1>}, {pipeline_mode = #tpu.pipeline_mode<synchronous>, transform_indices = @transform_1, window_bounds = array<i64: 384, 128>}, {transform_indices = @transform_2, window_bounds = array<i64: 32, 384>}, {transform_indices = @transform_3, window_bounds = array<i64: 32, 128>}]} {
    %c0 = arith.constant 0 : index
    %c0_0 = arith.constant 0 : index
    %0 = vector.load %arg3[%c0, %c0_0] : memref<32x384xf32, #tpu.memory_space<vmem>>, vector<32x384xf32>
    %c0_1 = arith.constant 0 : index
    %c0_2 = arith.constant 0 : index
    %1 = vector.load %arg2[%c0_1, %c0_2] : memref<384x128xf32, #tpu.memory_space<vmem>>, vector<384x128xf32>
    %cst = arith.constant dense<0.000000e+00> : vector<32x128xf32>
    %2 = tpu.matmul %0, %1, %cst {dimension_numbers = #tpu.dot_dimension_numbers<[1], [0], [0], [1], [0, 0, 1, 1], [], []>, precision = #tpu.contract_precision<fp32>} : vector<32x384xf32>, vector<384x128xf32>, vector<32x128xf32> -> vector<32x128xf32>
    %c0_3 = arith.constant 0 : index
    %3 = memref.load %arg1[%c0_3] : memref<1xf32, #tpu.memory_space<smem>>
    %4 = vector.broadcast %3 : f32 to vector<32x128xf32>
    %5 = arith.subf %2, %4 : vector<32x128xf32>
    %c0_4 = arith.constant 0 : index
    %c0_5 = arith.constant 0 : index
    %6 = vector.load %arg4[%c0_4, %c0_5] : memref<32x128xf32, #tpu.memory_space<vmem>>, vector<32x128xf32>
    tpu.vector_store %arg4[%c0_4, %c0_5], %5 {strides = array<i32>} : memref<32x128xf32, #tpu.memory_space<vmem>>, vector<32x128xf32>,
    return
  }
  func.func @transform_0(%arg0: i32) -> i32 {
    %c0_i32 = arith.constant 0 : i32
    %c0_i32_0 = arith.constant 0 : i32
    return %c0_i32 : i32
  }
  func.func @transform_1(%arg0: i32) -> (i32, i32) {
    %c0_i32 = arith.constant 0 : i32
    %c0_i32_0 = arith.constant 0 : i32
    %c0_i32_1 = arith.constant 0 : i32
    return %c0_i32, %c0_i32_0 : i32, i32
  }
  func.func @transform_2(%arg0: i32) -> (i32, i32) {
    %c0_i32 = arith.constant 0 : i32
    %c0_i32_0 = arith.constant 0 : i32
    return %arg0, %c0_i32 : i32, i32
  }
  func.func @transform_3(%arg0: i32) -> (i32, i32) {
    %c0_i32 = arith.constant 0 : i32
    %c0_i32_0 = arith.constant 0 : i32
    return %arg0, %c0_i32 : i32, i32
  }
}

</mosaic_0001>

<llo_original>
// kernel: tpu_custom_call.1
$region0: #{tpu_custom_call.1}
  #allocation0 [shape = 'u32[]', space=smem, size = 0x4, offset = 0x4, fixed_abs, tag = 'smem constant byte address 0x4 - core index']
  #allocation1 [shape = 'u32[72,128]{1,0:T(1,128)}', space=vmem, size = 0x9000, scoped, tag = 'internal scratch']
  #allocation2 [shape = 'f32[1]{0:T(128)S(6)}', space=smem, size = 0x200, scoped, tag = 'scoped memory for tpu_custom_call.1']
  %s0 = inlined_call_operand.<no memory space> [shape: f32[1], index: 0, kind: input, shape index: {}]
  %s1 = inlined_call_operand.hbm [shape: f32[384,128], index: 1, kind: input, shape index: {}]
  %s2 = inlined_call_operand.hbm [shape: f32[32,384], index: 2, kind: input, shape index: {}]
  %s3 = inlined_call_operand.hbm [shape: f32[32,128], index: 3, kind: output, shape index: {}]
  %s4 = sld [smem:[#allocation0]]
  $region30: #{tpu_custom_call.1} parent=0
    _
  %s6 = ssub.s32 1, %s4
  %s7 = scalar_select 0, %s6, %s4
  %8 = sst [smem:[#allocation2]] %s0
  $region1: #{tpu_custom_call.1} parent=0
    #allocation3 [shape = 'u8[196608]{0}', space=vmem, size = 0x30000, scoped, tag = 'input window, operand 1, single buffered']
    #allocation4 [shape = 's32[1]{0}', space=sflag, size = 0x4, scoped, tag = 'scoped memory for tpu_custom_call.1']
    #allocation5 [shape = 's32[1]{0}', space=sflag, size = 0x4, scoped, tag = 'scoped memory for tpu_custom_call.1']
    #allocation6 [shape = 'u8[49152]{0}', space=vmem, size = 0xc000, scoped, tag = 'input window, operand 2, single buffered']
    #allocation7 [shape = 's32[1]{0}', space=sflag, size = 0x4, scoped, tag = 'scoped memory for tpu_custom_call.1']
    #allocation8 [shape = 'u8[16384]{0}', space=vmem, size = 0x4000, scoped, tag = 'output window, operand 0, single buffered']
    %9 = vsyncpa [#allocation4], 0
    %10 = vsyncpa [#allocation7], 0
    %11 = vsyncpa [#allocation5], 0
    // Predicated region
    $region2: #{tpu_custom_call.1} parent=1 // pred_check
      _
    $region3: #{tpu_custom_call.1} parent=1 // pred_check_branch
      %13 = sbr.rel (0) target = $region5
    $region4: #{tpu_custom_call.1} parent=1 // pred_region
      _
    $region5: #{tpu_custom_call.1} parent=1 // pred_fallthru
      _
    // Predicated region
    $region6: #{tpu_custom_call.1} parent=1 // pred_check
      _
    $region7: #{tpu_custom_call.1} parent=1 // pred_check_branch
      %15 = sbr.rel (0) target = $region9
    $region8: #{tpu_custom_call.1} parent=1 // pred_region
      %17 = vsyncadd [#allocation4], 0
      %s18 = sshll.u32 %s1, 4
      %s19 = int_to_ptr.hbm [resolvable:$true] %s18
      %s20 = sshll.u32 [#allocation3], 4
      %s21 = int_to_ptr.vmem [resolvable:$true] %s20
      %26 = dma.hbm_to_vmem [thread:$0]  %s19, 6144, %s21, [#allocation4], 128, 128, 8
    $region9: #{tpu_custom_call.1} parent=1 // pred_fallthru
      _
    // Predicated region
    $region10: #{tpu_custom_call.1} parent=1 // pred_check
      _
    $region11: #{tpu_custom_call.1} parent=1 // pred_check_branch
      %28 = sbr.rel (0) target = $region13
    $region12: #{tpu_custom_call.1} parent=1 // pred_region
      %30 = vsyncadd [#allocation7], 0
      %s31 = sshll.u32 %s2, 4
      %s32 = int_to_ptr.hbm [resolvable:$true] %s31
      %s33 = sshll.u32 [#allocation6], 4
      %s34 = int_to_ptr.vmem [resolvable:$true] %s33
      %39 = dma.hbm_to_vmem [thread:$0]  %s32, 1536, %s34, [#allocation7], 384, 384, 24
    $region13: #{tpu_custom_call.1} parent=1 // pred_fallthru
      _
    // Predicated region
    $region14: #{tpu_custom_call.1} parent=1 // pred_check
      _
    $region15: #{tpu_custom_call.1} parent=1 // pred_check_branch
      %41 = sbr.rel (0) target = $region17
    $region16: #{tpu_custom_call.1} parent=1 // pred_region
      %43 = dma.done [#allocation4], 6144
    $region17: #{tpu_custom_call.1} parent=1 // pred_fallthru
      _
    // Predicated region
    $region18: #{tpu_custom_call.1} parent=1 // pred_check
      _
    $region19: #{tpu_custom_call.1} parent=1 // pred_check_branch
      %45 = sbr.rel (0) target = $region21
    $region20: #{tpu_custom_call.1} parent=1 // pred_region
      %47 = dma.done [#allocation7], 1536
    $region21: #{tpu_custom_call.1} parent=1 // pred_fallthru
      _
    %v48 = vld [vmem:[#allocation6] sm:$0xff]
    %v49 = vld [vmem:[#allocation6 + $0x8] sm:$0xff]
    %v50 = vld [vmem:[#allocation6 + $0x10] sm:$0xff]
    %v51 = vld [vmem:[#allocation6 + $0x18] sm:$0xff]
    %v52 = vld [vmem:[#allocation6 + $0x20] sm:$0xff]
    %v53 = vld [vmem:[#allocation6 + $0x28] sm:$0xff]
    %v54 = vld [vmem:[#allocation6 + $0x30] sm:$0xff]
    %v55 = vld [vmem:[#allocation6 + $0x38] sm:$0xff]
    %v56 = vld [vmem:[#allocation6 + $0x40] sm:$0xff]
    %v57 = vld [vmem:[#allocation6 + $0x48] sm:$0xff]
    %v58 = vld [vmem:[#allocation6 + $0x50] sm:$0xff]
    %v59 = vld [vmem:[#allocation6 + $0x58] sm:$0xff]
    %v60 = vld [vmem:[#allocation3] sm:$0xff]
    %v61 = vld [vmem:[#allocation3 + $0x8] sm:$0xff]
    %v62 = vld [vmem:[#allocation3 + $0x10] sm:$0xff]
    %v63 = vld [vmem:[#allocation3 + $0x18] sm:$0xff]
    %v64 = vld [vmem:[#allocation3 + $0x20] sm:$0xff]
    %v65 = vld [vmem:[#allocation3 + $0x28] sm:$0xff]
    %v66 = vld [vmem:[#allocation3 + $0x30] sm:$0xff]
    %v67 = vld [vmem:[#allocation3 + $0x38] sm:$0xff]
    %v68 = vld [vmem:[#allocation3 + $0x40] sm:$0xff]
    %v69 = vld [vmem:[#allocation3 + $0x48] sm:$0xff]
    %v70 = vld [vmem:[#allocation3 + $0x50] sm:$0xff]
    %v71 = vld [vmem:[#allocation3 + $0x58] sm:$0xff]
    %v72 = vld [vmem:[#allocation3 + $0x60] sm:$0xff]
    %v73 = vld [vmem:[#allocation3 + $0x68] sm:$0xff]
    %v74 = vld [vmem:[#allocation3 + $0x70] sm:$0xff]
    %v75 = vld [vmem:[#allocation3 + $0x78] sm:$0xff]
    %v76 = vld [vmem:[#allocation3 + $0x80] sm:$0xff]
    %v77 = vld [vmem:[#allocation3 + $0x88] sm:$0xff]
    %v78 = vld [vmem:[#allocation3 + $0x90] sm:$0xff]
    %v79 = vld [vmem:[#allocation3 + $0x98] sm:$0xff]
    %v80 = vld [vmem:[#allocation3 + $0xa0] sm:$0xff]
    %v81 = vld [vmem:[#allocation3 + $0xa8] sm:$0xff]
    %v82 = vld [vmem:[#allocation3 + $0xb0] sm:$0xff]
    %v83 = vld [vmem:[#allocation3 + $0xb8] sm:$0xff]
    %v84 = vld [vmem:[#allocation3 + $0xc0] sm:$0xff]
    %v85 = vld [vmem:[#allocation3 + $0xc8] sm:$0xff]
    %v86 = vld [vmem:[#allocation3 + $0xd0] sm:$0xff]
    %v87 = vld [vmem:[#allocation3 + $0xd8] sm:$0xff]
    %v88 = vld [vmem:[#allocation3 + $0xe0] sm:$0xff]
    %v89 = vld [vmem:[#allocation3 + $0xe8] sm:$0xff]
    %v90 = vld [vmem:[#allocation3 + $0xf0] sm:$0xff]
    %v91 = vld [vmem:[#allocation3 + $0xf8] sm:$0xff]
    %v92 = vld [vmem:[#allocation3 + $0x100] sm:$0xff]
    %v93 = vld [vmem:[#allocation3 + $0x108] sm:$0xff]
    %v94 = vld [vmem:[#allocation3 + $0x110] sm:$0xff]
    %v95 = vld [vmem:[#allocation3 + $0x118] sm:$0xff]
    %v96 = vld [vmem:[#allocation3 + $0x120] sm:$0xff]
    %v97 = vld [vmem:[#allocation3 + $0x128] sm:$0xff]
    %v98 = vld [vmem:[#allocation3 + $0x130] sm:$0xff]
    %v99 = vld [vmem:[#allocation3 + $0x138] sm:$0xff]
    %v100 = vld [vmem:[#allocation3 + $0x140] sm:$0xff]
    %v101 = vld [vmem:[#allocation3 + $0x148] sm:$0xff]
    %v102 = vld [vmem:[#allocation3 + $0x150] sm:$0xff]
    %v103 = vld [vmem:[#allocation3 + $0x158] sm:$0xff]
    %v104 = vld [vmem:[#allocation3 + $0x160] sm:$0xff]
    %v105 = vld [vmem:[#allocation3 + $0x168] sm:$0xff]
    %v106 = vld [vmem:[#allocation3 + $0x170] sm:$0xff]
    %v107 = vld [vmem:[#allocation3 + $0x178] sm:$0xff]
    %v108 = vand.u32 %v75, 4294901760
    %109 = vmatpush.msra.mxu0 %v108
    %v110 = vand.u32 %v74, 4294901760
    %111 = vmatpush.msra.mxu0 %v110
    %v112 = vand.u32 %v73, 4294901760
    %113 = vmatpush.msra.mxu0 %v112
    %v114 = vand.u32 %v72, 4294901760
    %115 = vmatpush.msra.mxu0 %v114
    %v116 = vand.u32 %v71, 4294901760
    %117 = vmatpush.msra.mxu0 %v116
    %v118 = vand.u32 %v70, 4294901760
    %119 = vmatpush.msra.mxu0 %v118
    %v120 = vand.u32 %v69, 4294901760
    %121 = vmatpush.msra.mxu0 %v120
    %v122 = vand.u32 %v68, 4294901760
    %123 = vmatpush.msra.mxu0 %v122
    %v124 = vand.u32 %v67, 4294901760
    %125 = vmatpush.msra.mxu0 %v124
    %v126 = vand.u32 %v66, 4294901760
    %127 = vmatpush.msra.mxu0 %v126
    %v128 = vand.u32 %v65, 4294901760
    %129 = vmatpush.msra.mxu0 %v128
    %v130 = vand.u32 %v64, 4294901760
    %131 = vmatpush.msra.mxu0 %v130
    %v132 = vand.u32 %v63, 4294901760
    %133 = vmatpush.msra.mxu0 %v132
    %v134 = vand.u32 %v62, 4294901760
    %135 = vmatpush.msra.mxu0 %v134
    %v136 = vand.u32 %v61, 4294901760
    %137 = vmatpush.msra.mxu0 %v136
    %v138 = vand.u32 %v60, 4294901760
    %139 = vmatpush.msra.mxu0 %v138
    %v140 = vand.u32 %v48, 4294901760
    %v141 = vsub.f32 %v48, %v140
    %v142 = vand.u32 %v141, 4294901760
    %v143 = vsub.f32 %v141, %v142
    %v144 = vand.u32 %v143, 4294901760
    %145 = vmatmul.f32.gmra.mxu0 %v144
    %v146 = vpop.f32.mrf.mxu0
    %v147 = vadd.f32 0.0, %v146
    %v148 = vand.u32 %v51, 4294901760
    %v149 = vsub.f32 %v51, %v148
    %v150 = vand.u32 %v149, 4294901760
    %v151 = vsub.f32 %v149, %v150
    %v152 = vand.u32 %v151, 4294901760
    %153 = vmatmul.f32.gmra.mxu0 %v152
    %v154 = vpop.f32.mrf.mxu0
    %v155 = vadd.f32 0.0, %v154
    %v156 = vand.u32 %v54, 4294901760
    %v157 = vsub.f32 %v54, %v156
    %v158 = vand.u32 %v157, 4294901760
    %v159 = vsub.f32 %v157, %v158
    %v160 = vand.u32 %v159, 4294901760
    %161 = vmatmul.f32.gmra.mxu0 %v160
    %v162 = vpop.f32.mrf.mxu0
    %v163 = vadd.f32 0.0, %v162
    %v164 = vand.u32 %v57, 4294901760
    %v165 = vsub.f32 %v57, %v164
    %v166 = vand.u32 %v165, 4294901760
    %v167 = vsub.f32 %v165, %v166
    %v168 = vand.u32 %v167, 4294901760
    %169 = vmatmul.f32.gmra.mxu0 %v168
    %v170 = vpop.f32.mrf.mxu0
    %v171 = vadd.f32 0.0, %v170
    %172 = vdwg.mxu0
    %v173 = vand.u32 %v75, 4294901760
    %v174 = vsub.f32 %v75, %v173
    %v175 = vand.u32 %v174, 4294901760
    %v176 = vsub.f32 %v174, %v175
    %v177 = vand.u32 %v176, 4294901760
    %178 = vmatpush.msra.mxu0 %v177
    %v179 = vand.u32 %v74, 4294901760
    %v180 = vsub.f32 %v74, %v179
    %v181 = vand.u32 %v180, 4294901760
    %v182 = vsub.f32 %v180, %v181
    %v183 = vand.u32 %v182, 4294901760
    %184 = vmatpush.msra.mxu0 %v183
    %v185 = vand.u32 %v73, 4294901760
    %v186 = vsub.f32 %v73, %v185
    %v187 = vand.u32 %v186, 4294901760
    %v188 = vsub.f32 %v186, %v187
    %v189 = vand.u32 %v188, 4294901760
    %190 = vmatpush.msra.mxu0 %v189
    %v191 = vand.u32 %v72, 4294901760
    %v192 = vsub.f32 %v72, %v191
    %v193 = vand.u32 %v192, 4294901760
    %v194 = vsub.f32 %v192, %v193
    %v195 = vand.u32 %v194, 4294901760
    %196 = vmatpush.msra.mxu0 %v195
    %v197 = vand.u32 %v71, 4294901760
    %v198 = vsub.f32 %v71, %v197
    %v199 = vand.u32 %v198, 4294901760
    %v200 = vsub.f32 %v198, %v199
    %v201 = vand.u32 %v200, 4294901760
    %202 = vmatpush.msra.mxu0 %v201
    %v203 = vand.u32 %v70, 4294901760
    %v204 = vsub.f32 %v70, %v203
    %v205 = vand.u32 %v204, 4294901760
    %v206 = vsub.f32 %v204, %v205
    %v207 = vand.u32 %v206, 4294901760
    %208 = vmatpush.msra.mxu0 %v207
    %v209 = vand.u32 %v69, 4294901760
    %v210 = vsub.f32 %v69, %v209
    %v211 = vand.u32 %v210, 4294901760
    %v212 = vsub.f32 %v210, %v211
    %v213 = vand.u32 %v212, 4294901760
    %214 = vmatpush.msra.mxu0 %v213
    %v215 = vand.u32 %v68, 4294901760
    %v216 = vsub.f32 %v68, %v215
    %v217 = vand.u32 %v216, 4294901760
    %v218 = vsub.f32 %v216, %v217
    %v219 = vand.u32 %v218, 4294901760
    %220 = vmatpush.msra.mxu0 %v219
    %v221 = vand.u32 %v67, 4294901760
    %v222 = vsub.f32 %v67, %v221
    %v223 = vand.u32 %v222, 4294901760
    %v224 = vsub.f32 %v222, %v223
    %v225 = vand.u32 %v224, 4294901760
    %226 = vmatpush.msra.mxu0 %v225
    %v227 = vand.u32 %v66, 4294901760
    %v228 = vsub.f32 %v66, %v227
    %v229 = vand.u32 %v228, 4294901760
    %v230 = vsub.f32 %v228, %v229
    %v231 = vand.u32 %v230, 4294901760
    %232 = vmatpush.msra.mxu0 %v231
    %v233 = vand.u32 %v65, 4294901760
    %v234 = vsub.f32 %v65, %v233
    %v235 = vand.u32 %v234, 4294901760
    %v236 = vsub.f32 %v234, %v235
    %v237 = vand.u32 %v236, 4294901760
    %238 = vmatpush.msra.mxu0 %v237
    %v239 = vand.u32 %v64, 4294901760
    %v240 = vsub.f32 %v64, %v239
    %v241 = vand.u32 %v240, 4294901760
    %v242 = vsub.f32 %v240, %v241
    %v243 = vand.u32 %v242, 4294901760
    %244 = vmatpush.msra.mxu0 %v243
    %v245 = vand.u32 %v63, 4294901760
    %v246 = vsub.f32 %v63, %v245
    %v247 = vand.u32 %v246, 4294901760
    %v248 = vsub.f32 %v246, %v247
    %v249 = vand.u32 %v248, 4294901760
    %250 = vmatpush.msra.mxu0 %v249
    %v251 = vand.u32 %v62, 4294901760
    %v252 = vsub.f32 %v62, %v251
    %v253 = vand.u32 %v252, 4294901760
    %v254 = vsub.f32 %v252, %v253
    %v255 = vand.u32 %v254, 4294901760
    %256 = vmatpush.msra.mxu0 %v255
    %v257 = vand.u32 %v61, 4294901760
    %v258 = vsub.f32 %v61, %v257
    %v259 = vand.u32 %v258, 4294901760
    %v260 = vsub.f32 %v258, %v259
    %v261 = vand.u32 %v260, 4294901760
    %262 = vmatpush.msra.mxu0 %v261
    %v263 = vand.u32 %v60, 4294901760
    %v264 = vsub.f32 %v60, %v263
    %v265 = vand.u32 %v264, 4294901760
    %v266 = vsub.f32 %v264, %v265
    %v267 = vand.u32 %v266, 4294901760
    %268 = vmatpush.msra.mxu0 %v267
    %v269 = vand.u32 %v48, 4294901760
    %270 = vmatmul.f32.gmra.mxu0 %v269
    %v271 = vpop.f32.mrf.mxu0
    %v272 = vadd.f32 %v147, %v271
    %v273 = vand.u32 %v51, 4294901760
    %274 = vmatmul.f32.gmra.mxu0 %v273
    %v275 = vpop.f32.mrf.mxu0
    %v276 = vadd.f32 %v155, %v275
    %v277 = vand.u32 %v54, 4294901760
    %278 = vmatmul.f32.gmra.mxu0 %v277
    %v279 = vpop.f32.mrf.mxu0
    %v280 = vadd.f32 %v163, %v279
    %v281 = vand.u32 %v57, 4294901760
    %282 = vmatmul.f32.gmra.mxu0 %v281
    %v283 = vpop.f32.mrf.mxu0
    %v284 = vadd.f32 %v171, %v283
    %285 = vdwg.mxu0
    %v286 = vand.u32 %v75, 4294901760
    %v287 = vsub.f32 %v75, %v286
    %288 = vmatpush.msra.mxu0 %v287
    %v289 = vand.u32 %v74, 4294901760
    %v290 = vsub.f32 %v74, %v289
    %291 = vmatpush.msra.mxu0 %v290
    %v292 = vand.u32 %v73, 4294901760
    %v293 = vsub.f32 %v73, %v292
    %294 = vmatpush.msra.mxu0 %v293
    %v295 = vand.u32 %v72, 4294901760
    %v296 = vsub.f32 %v72, %v295
    %297 = vmatpush.msra.mxu0 %v296
    %v298 = vand.u32 %v71, 4294901760
    %v299 = vsub.f32 %v71, %v298
    %300 = vmatpush.msra.mxu0 %v299
    %v301 = vand.u32 %v70, 4294901760
    %v302 = vsub.f32 %v70, %v301
    %303 = vmatpush.msra.mxu0 %v302
    %v304 = vand.u32 %v69, 4294901760
    %v305 = vsub.f32 %v69, %v304
    %306 = vmatpush.msra.mxu0 %v305
    %v307 = vand.u32 %v68, 4294901760
    %v308 = vsub.f32 %v68, %v307
    %309 = vmatpush.msra.mxu0 %v308
    %v310 = vand.u32 %v67, 4294901760
    %v311 = vsub.f32 %v67, %v310
    %312 = vmatpush.msra.mxu0 %v311
    %v313 = vand.u32 %v66, 4294901760
    %v314 = vsub.f32 %v66, %v313
    %315 = vmatpush.msra.mxu0 %v314
    %v316 = vand.u32 %v65, 4294901760
    %v317 = vsub.f32 %v65, %v316
    %318 = vmatpush.msra.mxu0 %v317
    %v319 = vand.u32 %v64, 4294901760
    %v320 = vsub.f32 %v64, %v319
    %321 = vmatpush.msra.mxu0 %v320
    %v322 = vand.u32 %v63, 4294901760
    %v323 = vsub.f32 %v63, %v322
    %324 = vmatpush.msra.mxu0 %v323
    %v325 = vand.u32 %v62, 4294901760
    %v326 = vsub.f32 %v62, %v325
    %327 = vmatpush.msra.mxu0 %v326
    %v328 = vand.u32 %v61, 4294901760
    %v329 = vsub.f32 %v61, %v328
    %330 = vmatpush.msra.mxu0 %v329
    %v331 = vand.u32 %v60, 4294901760
    %v332 = vsub.f32 %v60, %v331
    %333 = vmatpush.msra.mxu0 %v332
    %v334 = vand.u32 %v48, 4294901760
    %v335 = vsub.f32 %v48, %v334
    %336 = vmatmul.f32.gmra.mxu0 %v335
    %v337 = vpop.f32.mrf.mxu0
    %v338 = vadd.f32 %v272, %v337
    %v339 = vand.u32 %v51, 4294901760
    %v340 = vsub.f32 %v51, %v339
    %341 = vmatmul.f32.gmra.mxu0 %v340
    %v342 = vpop.f32.mrf.mxu0
    %v343 = vadd.f32 %v276, %v342
    %v344 = vand.u32 %v54, 4294901760
    %v345 = vsub.f32 %v54, %v344
    %346 = vmatmul.f32.gmra.mxu0 %v345
    %v347 = vpop.f32.mrf.mxu0
    %v348 = vadd.f32 %v280, %v347
    %v349 = vand.u32 %v57, 4294901760
    %v350 = vsub.f32 %v57, %v349
    %351 = vmatmul.f32.gmra.mxu0 %v350
    %v352 = vpop.f32.mrf.mxu0
    %v353 = vadd.f32 %v284, %v352
    %354 = vdwg.mxu0
    %v355 = vand.u32 %v75, 4294901760
    %356 = vmatpush.msra.mxu0 %v355
    %v357 = vand.u32 %v74, 4294901760
    %358 = vmatpush.msra.mxu0 %v357
    %v359 = vand.u32 %v73, 4294901760
    %360 = vmatpush.msra.mxu0 %v359
    %v361 = vand.u32 %v72, 4294901760
    %362 = vmatpush.msra.mxu0 %v361
    %v363 = vand.u32 %v71, 4294901760
    %364 = vmatpush.msra.mxu0 %v363
    %v365 = vand.u32 %v70, 4294901760
    %366 = vmatpush.msra.mxu0 %v365
    %v367 = vand.u32 %v69, 4294901760
    %368 = vmatpush.msra.mxu0 %v367
    %v369 = vand.u32 %v68, 4294901760
    %370 = vmatpush.msra.mxu0 %v369
    %v371 = vand.u32 %v67, 4294901760
    %372 = vmatpush.msra.mxu0 %v371
    %v373 = vand.u32 %v66, 4294901760
    %374 = vmatpush.msra.mxu0 %v373
    %v375 = vand.u32 %v65, 4294901760
    %376 = vmatpush.msra.mxu0 %v375
    %v377 = vand.u32 %v64, 4294901760
    %378 = vmatpush.msra.mxu0 %v377
    %v379 = vand.u32 %v63, 4294901760
    %380 = vmatpush.msra.mxu0 %v379
    %v381 = vand.u32 %v62, 4294901760
    %382 = vmatpush.msra.mxu0 %v381
    %v383 = vand.u32 %v61, 4294901760
    %384 = vmatpush.msra.mxu0 %v383
    %v385 = vand.u32 %v60, 4294901760
    %386 = vmatpush.msra.mxu0 %v385
    %v387 = vand.u32 %v48, 4294901760
    %v388 = vsub.f32 %v48, %v387
    %v389 = vand.u32 %v388, 4294901760
    %390 = vmatmul.f32.gmra.mxu0 %v389
    %v391 = vpop.f32.mrf.mxu0
    %v392 = vadd.f32 %v338, %v391
    %v393 = vand.u32 %v51, 4294901760
    %v394 = vsub.f32 %v51, %v393
    %v395 = vand.u32 %v394, 4294901760
    %396 = vmatmul.f32.gmra.mxu0 %v395
    %v397 = vpop.f32.mrf.mxu0
    %v398 = vadd.f32 %v343, %v397
    %v399 = vand.u32 %v54, 4294901760
    %v400 = vsub.f32 %v54, %v399
    %v401 = vand.u32 %v400, 4294901760
    %402 = vmatmul.f32.gmra.mxu0 %v401
    %v403 = vpop.f32.mrf.mxu0
    %v404 = vadd.f32 %v348, %v403
    %v405 = vand.u32 %v57, 4294901760
    %v406 = vsub.f32 %v57, %v405
    %v407 = vand.u32 %v406, 4294901760
    %408 = vmatmul.f32.gmra.mxu0 %v407
    %v409 = vpop.f32.mrf.mxu0
    %v410 = vadd.f32 %v353, %v409
    %411 = vdwg.mxu0
    %v412 = vand.u32 %v75, 4294901760
    %v413 = vsub.f32 %v75, %v412
    %v414 = vand.u32 %v413, 4294901760
    %415 = vmatpush.msra.mxu0 %v414
    %v416 = vand.u32 %v74, 4294901760
    %v417 = vsub.f32 %v74, %v416
    %v418 = vand.u32 %v417, 4294901760
    %419 = vmatpush.msra.mxu0 %v418
    %v420 = vand.u32 %v73, 4294901760
    %v421 = vsub.f32 %v73, %v420
    %v422 = vand.u32 %v421, 4294901760
    %423 = vmatpush.msra.mxu0 %v422
    %v424 = vand.u32 %v72, 4294901760
    %v425 = vsub.f32 %v72, %v424
    %v426 = vand.u32 %v425, 4294901760
    %427 = vmatpush.msra.mxu0 %v426
    %v428 = vand.u32 %v71, 4294901760
    %v429 = vsub.f32 %v71, %v428
    %v430 = vand.u32 %v429, 4294901760
    %431 = vmatpush.msra.mxu0 %v430
    %v432 = vand.u32 %v70, 4294901760
    %v433 = vsub.f32 %v70, %v432
    %v434 = vand.u32 %v433, 4294901760
    %435 = vmatpush.msra.mxu0 %v434
    %v436 = vand.u32 %v69, 4294901760
    %v437 = vsub.f32 %v69, %v436
    %v438 = vand.u32 %v437, 4294901760
    %439 = vmatpush.msra.mxu0 %v438
    %v440 = vand.u32 %v68, 4294901760
    %v441 = vsub.f32 %v68, %v440
    %v442 = vand.u32 %v441, 4294901760
    %443 = vmatpush.msra.mxu0 %v442
    %v444 = vand.u32 %v67, 4294901760
    %v445 = vsub.f32 %v67, %v444
    %v446 = vand.u32 %v445, 4294901760
    %447 = vmatpush.msra.mxu0 %v446
    %v448 = vand.u32 %v66, 4294901760
    %v449 = vsub.f32 %v66, %v448
    %v450 = vand.u32 %v449, 4294901760
    %451 = vmatpush.msra.mxu0 %v450
    %v452 = vand.u32 %v65, 4294901760
    %v453 = vsub.f32 %v65, %v452
    %v454 = vand.u32 %v453, 4294901760
    %455 = vmatpush.msra.mxu0 %v454
    %v456 = vand.u32 %v64, 4294901760
    %v457 = vsub.f32 %v64, %v456
    %v458 = vand.u32 %v457, 4294901760
    %459 = vmatpush.msra.mxu0 %v458
    %v460 = vand.u32 %v63, 4294901760
    %v461 = vsub.f32 %v63, %v460
    %v462 = vand.u32 %v461, 4294901760
    %463 = vmatpush.msra.mxu0 %v462
    %v464 = vand.u32 %v62, 4294901760
    %v465 = vsub.f32 %v62, %v464
    %v466 = vand.u32 %v465, 4294901760
    %467 = vmatpush.msra.mxu0 %v466
    %v468 = vand.u32 %v61, 4294901760
    %v469 = vsub.f32 %v61, %v468
    %v470 = vand.u32 %v469, 4294901760
    %471 = vmatpush.msra.mxu0 %v470
    %v472 = vand.u32 %v60, 4294901760
    %v473 = vsub.f32 %v60, %v472
    %v474 = vand.u32 %v473, 4294901760
    %475 = vmatpush.msra.mxu0 %v474
    %v476 = vand.u32 %v48, 4294901760
    %477 = vmatmul.f32.gmra.mxu0 %v476
    %v478 = vpop.f32.mrf.mxu0
    %v479 = vadd.f32 %v392, %v478
    %v480 = vand.u32 %v51, 4294901760
    %481 = vmatmul.f32.gmra.mxu0 %v480
    %v482 = vpop.f32.mrf.mxu0
    %v483 = vadd.f32 %v398, %v482
    %v484 = vand.u32 %v54, 4294901760
    %485 = vmatmul.f32.gmra.mxu0 %v484
    %v486 = vpop.f32.mrf.mxu0
    %v487 = vadd.f32 %v404, %v486
    %v488 = vand.u32 %v57, 4294901760
    %489 = vmatmul.f32.gmra.mxu0 %v488
    %v490 = vpop.f32.mrf.mxu0
    %v491 = vadd.f32 %v410, %v490
    %492 = vdwg.mxu0
    %v493 = vand.u32 %v75, 4294901760
    %494 = vmatpush.msra.mxu0 %v493
    %v495 = vand.u32 %v74, 4294901760
    %496 = vmatpush.msra.mxu0 %v495
    %v497 = vand.u32 %v73, 4294901760
    %498 = vmatpush.msra.mxu0 %v497
    %v499 = vand.u32 %v72, 4294901760
    %500 = vmatpush.msra.mxu0 %v499
    %v501 = vand.u32 %v71, 4294901760
    %502 = vmatpush.msra.mxu0 %v501
    %v503 = vand.u32 %v70, 4294901760
    %504 = vmatpush.msra.mxu0 %v503
    %v505 = vand.u32 %v69, 4294901760
    %506 = vmatpush.msra.mxu0 %v505
    %v507 = vand.u32 %v68, 4294901760
    %508 = vmatpush.msra.mxu0 %v507
    %v509 = vand.u32 %v67, 4294901760
    %510 = vmatpush.msra.mxu0 %v509
    %v511 = vand.u32 %v66, 4294901760
    %512 = vmatpush.msra.mxu0 %v511
    %v513 = vand.u32 %v65, 4294901760
    %514 = vmatpush.msra.mxu0 %v513
    %v515 = vand.u32 %v64, 4294901760
    %516 = vmatpush.msra.mxu0 %v515
    %v517 = vand.u32 %v63, 4294901760
    %518 = vmatpush.msra.mxu0 %v517
    %v519 = vand.u32 %v62, 4294901760
    %520 = vmatpush.msra.mxu0 %v519
    %v521 = vand.u32 %v61, 4294901760
    %522 = vmatpush.msra.mxu0 %v521
    %v523 = vand.u32 %v60, 4294901760
    %524 = vmatpush.msra.mxu0 %v523
    %v525 = vand.u32 %v48, 4294901760
    %526 = vmatmul.f32.gmra.mxu0 %v525
    %v527 = vpop.f32.mrf.mxu0
    %v528 = vadd.f32 %v479, %v527
    %v529 = vand.u32 %v51, 4294901760
    %530 = vmatmul.f32.gmra.mxu0 %v529
    %v531 = vpop.f32.mrf.mxu0
    %v532 = vadd.f32 %v483, %v531
    %v533 = vand.u32 %v54, 4294901760
    %534 = vmatmul.f32.gmra.mxu0 %v533
    %v535 = vpop.f32.mrf.mxu0
    %v536 = vadd.f32 %v487, %v535
    %v537 = vand.u32 %v57, 4294901760
    %538 = vmatmul.f32.gmra.mxu0 %v537
    %v539 = vpop.f32.mrf.mxu0
    %v540 = vadd.f32 %v491, %v539
    %541 = vdwg.mxu0
    %v542 = vand.u32 %v91, 4294901760
    %543 = vmatpush.msra.mxu0 %v542
    %v544 = vand.u32 %v90, 4294901760
    %545 = vmatpush.msra.mxu0 %v544
    %v546 = vand.u32 %v89, 4294901760
    %547 = vmatpush.msra.mxu0 %v546
    %v548 = vand.u32 %v88, 4294901760
    %549 = vmatpush.msra.mxu0 %v548
    %v550 = vand.u32 %v87, 4294901760
    %551 = vmatpush.msra.mxu0 %v550
    %v552 = vand.u32 %v86, 4294901760
    %553 = vmatpush.msra.mxu0 %v552
    %v554 = vand.u32 %v85, 4294901760
    %555 = vmatpush.msra.mxu0 %v554
    %v556 = vand.u32 %v84, 4294901760
    %557 = vmatpush.msra.mxu0 %v556
    %v558 = vand.u32 %v83, 4294901760
    %559 = vmatpush.msra.mxu0 %v558
    %v560 = vand.u32 %v82, 4294901760
    %561 = vmatpush.msra.mxu0 %v560
    %v562 = vand.u32 %v81, 4294901760
    %563 = vmatpush.msra.mxu0 %v562
    %v564 = vand.u32 %v80, 4294901760
    %565 = vmatpush.msra.mxu0 %v564
    %v566 = vand.u32 %v79, 4294901760
    %567 = vmatpush.msra.mxu0 %v566
    %v568 = vand.u32 %v78, 4294901760
    %569 = vmatpush.msra.mxu0 %v568
    %v570 = vand.u32 %v77, 4294901760
    %571 = vmatpush.msra.mxu0 %v570
    %v572 = vand.u32 %v76, 4294901760
    %573 = vmatpush.msra.mxu0 %v572
    %v574 = vand.u32 %v49, 4294901760
    %v575 = vsub.f32 %v49, %v574
    %v576 = vand.u32 %v575, 4294901760
    %v577 = vsub.f32 %v575, %v576
    %v578 = vand.u32 %v577, 4294901760
    %579 = vmatmul.f32.gmra.mxu0 %v578
    %v580 = vpop.f32.mrf.mxu0
    %v581 = vadd.f32 %v528, %v580
    %v582 = vand.u32 %v52, 4294901760
    %v583 = vsub.f32 %v52, %v582
    %v584 = vand.u32 %v583, 4294901760
    %v585 = vsub.f32 %v583, %v584
    %v586 = vand.u32 %v585, 4294901760
    %587 = vmatmul.f32.gmra.mxu0 %v586
    %v588 = vpop.f32.mrf.mxu0
    %v589 = vadd.f32 %v532, %v588
    %v590 = vand.u32 %v55, 4294901760
    %v591 = vsub.f32 %v55, %v590
    %v592 = vand.u32 %v591, 4294901760
    %v593 = vsub.f32 %v591, %v592
    %v594 = vand.u32 %v593, 4294901760
    %595 = vmatmul.f32.gmra.mxu0 %v594
    %v596 = vpop.f32.mrf.mxu0
    %v597 = vadd.f32 %v536, %v596
    %v598 = vand.u32 %v58, 4294901760
    %v599 = vsub.f32 %v58, %v598
    %v600 = vand.u32 %v599, 4294901760
    %v601 = vsub.f32 %v599, %v600
    %v602 = vand.u32 %v601, 4294901760
    %603 = vmatmul.f32.gmra.mxu0 %v602
    %v604 = vpop.f32.mrf.mxu0
    %v605 = vadd.f32 %v540, %v604
    %606 = vdwg.mxu0
    %v607 = vand.u32 %v91, 4294901760
    %v608 = vsub.f32 %v91, %v607
    %v609 = vand.u32 %v608, 4294901760
    %v610 = vsub.f32 %v608, %v609
    %v611 = vand.u32 %v610, 4294901760
    %612 = vmatpush.msra.mxu0 %v611
    %v613 = vand.u32 %v90, 4294901760
    %v614 = vsub.f32 %v90, %v613
    %v615 = vand.u32 %v614, 4294901760
    %v616 = vsub.f32 %v614, %v615
    %v617 = vand.u32 %v616, 4294901760
    %618 = vmatpush.msra.mxu0 %v617
    %v619 = vand.u32 %v89, 4294901760
    %v620 = vsub.f32 %v89, %v619
    %v621 = vand.u32 %v620, 4294901760
    %v622 = vsub.f32 %v620, %v621
    %v623 = vand.u32 %v622, 4294901760
    %624 = vmatpush.msra.mxu0 %v623
    %v625 = vand.u32 %v88, 4294901760
    %v626 = vsub.f32 %v88, %v625
    %v627 = vand.u32 %v626, 4294901760
    %v628 = vsub.f32 %v626, %v627
    %v629 = vand.u32 %v628, 4294901760
    %630 = vmatpush.msra.mxu0 %v629
    %v631 = vand.u32 %v87, 4294901760
    %v632 = vsub.f32 %v87, %v631
    %v633 = vand.u32 %v632, 4294901760
    %v634 = vsub.f32 %v632, %v633
    %v635 = vand.u32 %v634, 4294901760
    %636 = vmatpush.msra.mxu0 %v635
    %v637 = vand.u32 %v86, 4294901760
    %v638 = vsub.f32 %v86, %v637
    %v639 = vand.u32 %v638, 4294901760
    %v640 = vsub.f32 %v638, %v639
    %v641 = vand.u32 %v640, 4294901760
    %642 = vmatpush.msra.mxu0 %v641
    %v643 = vand.u32 %v85, 4294901760
    %v644 = vsub.f32 %v85, %v643
    %v645 = vand.u32 %v644, 4294901760
    %v646 = vsub.f32 %v644, %v645
    %v647 = vand.u32 %v646, 4294901760
    %648 = vmatpush.msra.mxu0 %v647
    %v649 = vand.u32 %v84, 4294901760
    %v650 = vsub.f32 %v84, %v649
    %v651 = vand.u32 %v650, 4294901760
    %v652 = vsub.f32 %v650, %v651
    %v653 = vand.u32 %v652, 4294901760
    %654 = vmatpush.msra.mxu0 %v653
    %v655 = vand.u32 %v83, 4294901760
    %v656 = vsub.f32 %v83, %v655
    %v657 = vand.u32 %v656, 4294901760
    %v658 = vsub.f32 %v656, %v657
    %v659 = vand.u32 %v658, 4294901760
    %660 = vmatpush.msra.mxu0 %v659
    %v661 = vand.u32 %v82, 4294901760
    %v662 = vsub.f32 %v82, %v661
    %v663 = vand.u32 %v662, 4294901760
    %v664 = vsub.f32 %v662, %v663
    %v665 = vand.u32 %v664, 4294901760
    %666 = vmatpush.msra.mxu0 %v665
    %v667 = vand.u32 %v81, 4294901760
    %v668 = vsub.f32 %v81, %v667
    %v669 = vand.u32 %v668, 4294901760
    %v670 = vsub.f32 %v668, %v669
    %v671 = vand.u32 %v670, 4294901760
    %672 = vmatpush.msra.mxu0 %v671
    %v673 = vand.u32 %v80, 4294901760
    %v674 = vsub.f32 %v80, %v673
    %v675 = vand.u32 %v674, 4294901760
    %v676 = vsub.f32 %v674, %v675
    %v677 = vand.u32 %v676, 4294901760
    %678 = vmatpush.msra.mxu0 %v677
    %v679 = vand.u32 %v79, 4294901760
    %v680 = vsub.f32 %v79, %v679
    %v681 = vand.u32 %v680, 4294901760
    %v682 = vsub.f32 %v680, %v681
    %v683 = vand.u32 %v682, 4294901760
    %684 = vmatpush.msra.mxu0 %v683
    %v685 = vand.u32 %v78, 4294901760
    %v686 = vsub.f32 %v78, %v685
    %v687 = vand.u32 %v686, 4294901760
    %v688 = vsub.f32 %v686, %v687
    %v689 = vand.u32 %v688, 4294901760
    %690 = vmatpush.msra.mxu0 %v689
    %v691 = vand.u32 %v77, 4294901760
    %v692 = vsub.f32 %v77, %v691
    %v693 = vand.u32 %v692, 4294901760
    %v694 = vsub.f32 %v692, %v693
    %v695 = vand.u32 %v694, 4294901760
    %696 = vmatpush.msra.mxu0 %v695
    %v697 = vand.u32 %v76, 4294901760
    %v698 = vsub.f32 %v76, %v697
    %v699 = vand.u32 %v698, 4294901760
    %v700 = vsub.f32 %v698, %v699
    %v701 = vand.u32 %v700, 4294901760
    %702 = vmatpush.msra.mxu0 %v701
    %v703 = vand.u32 %v49, 4294901760
    %704 = vmatmul.f32.gmra.mxu0 %v703
    %v705 = vpop.f32.mrf.mxu0
    %v706 = vadd.f32 %v581, %v705
    %v707 = vand.u32 %v52, 4294901760
    %708 = vmatmul.f32.gmra.mxu0 %v707
    %v709 = vpop.f32.mrf.mxu0
    %v710 = vadd.f32 %v589, %v709
    %v711 = vand.u32 %v55, 4294901760
    %712 = vmatmul.f32.gmra.mxu0 %v711
    %v713 = vpop.f32.mrf.mxu0
    %v714 = vadd.f32 %v597, %v713
    %v715 = vand.u32 %v58, 4294901760
    %716 = vmatmul.f32.gmra.mxu0 %v715
    %v717 = vpop.f32.mrf.mxu0
    %v718 = vadd.f32 %v605, %v717
    %719 = vdwg.mxu0
    %v720 = vand.u32 %v91, 4294901760
    %v721 = vsub.f32 %v91, %v720
    %722 = vmatpush.msra.mxu0 %v721
    %v723 = vand.u32 %v90, 4294901760
    %v724 = vsub.f32 %v90, %v723
    %725 = vmatpush.msra.mxu0 %v724
    %v726 = vand.u32 %v89, 4294901760
    %v727 = vsub.f32 %v89, %v726
    %728 = vmatpush.msra.mxu0 %v727
    %v729 = vand.u32 %v88, 4294901760
    %v730 = vsub.f32 %v88, %v729
    %731 = vmatpush.msra.mxu0 %v730
    %v732 = vand.u32 %v87, 4294901760
    %v733 = vsub.f32 %v87, %v732
    %734 = vmatpush.msra.mxu0 %v733
    %v735 = vand.u32 %v86, 4294901760
    %v736 = vsub.f32 %v86, %v735
    %737 = vmatpush.msra.mxu0 %v736
    %v738 = vand.u32 %v85, 4294901760
    %v739 = vsub.f32 %v85, %v738
    %740 = vmatpush.msra.mxu0 %v739
    %v741 = vand.u32 %v84, 4294901760
    %v742 = vsub.f32 %v84, %v741
    %743 = vmatpush.msra.mxu0 %v742
    %v744 = vand.u32 %v83, 4294901760
    %v745 = vsub.f32 %v83, %v744
    %746 = vmatpush.msra.mxu0 %v745
    %v747 = vand.u32 %v82, 4294901760
    %v748 = vsub.f32 %v82, %v747
    %749 = vmatpush.msra.mxu0 %v748
    %v750 = vand.u32 %v81, 4294901760
    %v751 = vsub.f32 %v81, %v750
    %752 = vmatpush.msra.mxu0 %v751
    %v753 = vand.u32 %v80, 4294901760
    %v754 = vsub.f32 %v80, %v753
    %755 = vmatpush.msra.mxu0 %v754
    %v756 = vand.u32 %v79, 4294901760
    %v757 = vsub.f32 %v79, %v756
    %758 = vmatpush.msra.mxu0 %v757
    %v759 = vand.u32 %v78, 4294901760
    %v760 = vsub.f32 %v78, %v759
    %761 = vmatpush.msra.mxu0 %v760
    %v762 = vand.u32 %v77, 4294901760
    %v763 = vsub.f32 %v77, %v762
    %764 = vmatpush.msra.mxu0 %v763
    %v765 = vand.u32 %v76, 4294901760
    %v766 = vsub.f32 %v76, %v765
    %767 = vmatpush.msra.mxu0 %v766
    %v768 = vand.u32 %v49, 4294901760
    %v769 = vsub.f32 %v49, %v768
    %770 = vmatmul.f32.gmra.mxu0 %v769
    %v771 = vpop.f32.mrf.mxu0
    %v772 = vadd.f32 %v706, %v771
    %v773 = vand.u32 %v52, 4294901760
    %v774 = vsub.f32 %v52, %v773
    %775 = vmatmul.f32.gmra.mxu0 %v774
    %v776 = vpop.f32.mrf.mxu0
    %v777 = vadd.f32 %v710, %v776
    %v778 = vand.u32 %v55, 4294901760
    %v779 = vsub.f32 %v55, %v778
    %780 = vmatmul.f32.gmra.mxu0 %v779
    %v781 = vpop.f32.mrf.mxu0
    %v782 = vadd.f32 %v714, %v781
    %v783 = vand.u32 %v58, 4294901760
    %v784 = vsub.f32 %v58, %v783
    %785 = vmatmul.f32.gmra.mxu0 %v784
    %v786 = vpop.f32.mrf.mxu0
    %v787 = vadd.f32 %v718, %v786
    %788 = vdwg.mxu0
    %v789 = vand.u32 %v91, 4294901760
    %790 = vmatpush.msra.mxu0 %v789
    %v791 = vand.u32 %v90, 4294901760
    %792 = vmatpush.msra.mxu0 %v791
    %v793 = vand.u32 %v89, 4294901760
    %794 = vmatpush.msra.mxu0 %v793
    %v795 = vand.u32 %v88, 4294901760
    %796 = vmatpush.msra.mxu0 %v795
    %v797 = vand.u32 %v87, 4294901760
    %798 = vmatpush.msra.mxu0 %v797
    %v799 = vand.u32 %v86, 4294901760
    %800 = vmatpush.msra.mxu0 %v799
    %v801 = vand.u32 %v85, 4294901760
    %802 = vmatpush.msra.mxu0 %v801
    %v803 = vand.u32 %v84, 4294901760
    %804 = vmatpush.msra.mxu0 %v803
    %v805 = vand.u32 %v83, 4294901760
    %806 = vmatpush.msra.mxu0 %v805
    %v807 = vand.u32 %v82, 4294901760
    %808 = vmatpush.msra.mxu0 %v807
    %v809 = vand.u32 %v81, 4294901760
    %810 = vmatpush.msra.mxu0 %v809
    %v811 = vand.u32 %v80, 4294901760
    %812 = vmatpush.msra.mxu0 %v811
    %v813 = vand.u32 %v79, 4294901760
    %814 = vmatpush.msra.mxu0 %v813
    %v815 = vand.u32 %v78, 4294901760
    %816 = vmatpush.msra.mxu0 %v815
    %v817 = vand.u32 %v77, 4294901760
    %818 = vmatpush.msra.mxu0 %v817
    %v819 = vand.u32 %v76, 4294901760
    %820 = vmatpush.msra.mxu0 %v819
    %v821 = vand.u32 %v49, 4294901760
    %v822 = vsub.f32 %v49, %v821
    %v823 = vand.u32 %v822, 4294901760
    %824 = vmatmul.f32.gmra.mxu0 %v823
    %v825 = vpop.f32.mrf.mxu0
    %v826 = vadd.f32 %v772, %v825
    %v827 = vand.u32 %v52, 4294901760
    %v828 = vsub.f32 %v52, %v827
    %v829 = vand.u32 %v828, 4294901760
    %830 = vmatmul.f32.gmra.mxu0 %v829
    %v831 = vpop.f32.mrf.mxu0
    %v832 = vadd.f32 %v777, %v831
    %v833 = vand.u32 %v55, 4294901760
    %v834 = vsub.f32 %v55, %v833
    %v835 = vand.u32 %v834, 4294901760
    %836 = vmatmul.f32.gmra.mxu0 %v835
    %v837 = vpop.f32.mrf.mxu0
    %v838 = vadd.f32 %v782, %v837
    %v839 = vand.u32 %v58, 4294901760
    %v840 = vsub.f32 %v58, %v839
    %v841 = vand.u32 %v840, 4294901760
    %842 = vmatmul.f32.gmra.mxu0 %v841
    %v843 = vpop.f32.mrf.mxu0
    %v844 = vadd.f32 %v787, %v843
    %845 = vdwg.mxu0
    %v846 = vand.u32 %v91, 4294901760
    %v847 = vsub.f32 %v91, %v846
    %v848 = vand.u32 %v847, 4294901760
    %849 = vmatpush.msra.mxu0 %v848
    %v850 = vand.u32 %v90, 4294901760
    %v851 = vsub.f32 %v90, %v850
    %v852 = vand.u32 %v851, 4294901760
    %853 = vmatpush.msra.mxu0 %v852
    %v854 = vand.u32 %v89, 4294901760
    %v855 = vsub.f32 %v89, %v854
    %v856 = vand.u32 %v855, 4294901760
    %857 = vmatpush.msra.mxu0 %v856
    %v858 = vand.u32 %v88, 4294901760
    %v859 = vsub.f32 %v88, %v858
    %v860 = vand.u32 %v859, 4294901760
    %861 = vmatpush.msra.mxu0 %v860
    %v862 = vand.u32 %v87, 4294901760
    %v863 = vsub.f32 %v87, %v862
    %v864 = vand.u32 %v863, 4294901760
    %865 = vmatpush.msra.mxu0 %v864
    %v866 = vand.u32 %v86, 4294901760
    %v867 = vsub.f32 %v86, %v866
    %v868 = vand.u32 %v867, 4294901760
    %869 = vmatpush.msra.mxu0 %v868
    %v870 = vand.u32 %v85, 4294901760
    %v871 = vsub.f32 %v85, %v870
    %v872 = vand.u32 %v871, 4294901760
    %873 = vmatpush.msra.mxu0 %v872
    %v874 = vand.u32 %v84, 4294901760
    %v875 = vsub.f32 %v84, %v874
    %v876 = vand.u32 %v875, 4294901760
    %877 = vmatpush.msra.mxu0 %v876
    %v878 = vand.u32 %v83, 4294901760
    %v879 = vsub.f32 %v83, %v878
    %v880 = vand.u32 %v879, 4294901760
    %881 = vmatpush.msra.mxu0 %v880
    %v882 = vand.u32 %v82, 4294901760
    %v883 = vsub.f32 %v82, %v882
    %v884 = vand.u32 %v883, 4294901760
    %885 = vmatpush.msra.mxu0 %v884
    %v886 = vand.u32 %v81, 4294901760
    %v887 = vsub.f32 %v81, %v886
    %v888 = vand.u32 %v887, 4294901760
    %889 = vmatpush.msra.mxu0 %v888
    %v890 = vand.u32 %v80, 4294901760
    %v891 = vsub.f32 %v80, %v890
    %v892 = vand.u32 %v891, 4294901760
    %893 = vmatpush.msra.mxu0 %v892
    %v894 = vand.u32 %v79, 4294901760
    %v895 = vsub.f32 %v79, %v894
    %v896 = vand.u32 %v895, 4294901760
    %897 = vmatpush.msra.mxu0 %v896
    %v898 = vand.u32 %v78, 4294901760
    %v899 = vsub.f32 %v78, %v898
    %v900 = vand.u32 %v899, 4294901760
    %901 = vmatpush.msra.mxu0 %v900
    %v902 = vand.u32 %v77, 4294901760
    %v903 = vsub.f32 %v77, %v902
    %v904 = vand.u32 %v903, 4294901760
    %905 = vmatpush.msra.mxu0 %v904
    %v906 = vand.u32 %v76, 4294901760
    %v907 = vsub.f32 %v76, %v906
    %v908 = vand.u32 %v907, 4294901760
    %909 = vmatpush.msra.mxu0 %v908
    %v910 = vand.u32 %v49, 4294901760
    %911 = vmatmul.f32.gmra.mxu0 %v910
    %v912 = vpop.f32.mrf.mxu0
    %v913 = vadd.f32 %v826, %v912
    %v914 = vand.u32 %v52, 4294901760
    %915 = vmatmul.f32.gmra.mxu0 %v914
    %v916 = vpop.f32.mrf.mxu0
    %v917 = vadd.f32 %v832, %v916
    %v918 = vand.u32 %v55, 4294901760
    %919 = vmatmul.f32.gmra.mxu0 %v918
    %v920 = vpop.f32.mrf.mxu0
    %v921 = vadd.f32 %v838, %v920
    %v922 = vand.u32 %v58, 4294901760
    %923 = vmatmul.f32.gmra.mxu0 %v922
    %v924 = vpop.f32.mrf.mxu0
    %v925 = vadd.f32 %v844, %v924
    %926 = vdwg.mxu0
    %v927 = vand.u32 %v91, 4294901760
    %928 = vmatpush.msra.mxu0 %v927
    %v929 = vand.u32 %v90, 4294901760
    %930 = vmatpush.msra.mxu0 %v929
    %v931 = vand.u32 %v89, 4294901760
    %932 = vmatpush.msra.mxu0 %v931
    %v933 = vand.u32 %v88, 4294901760
    %934 = vmatpush.msra.mxu0 %v933
    %v935 = vand.u32 %v87, 4294901760
    %936 = vmatpush.msra.mxu0 %v935
    %v937 = vand.u32 %v86, 4294901760
    %938 = vmatpush.msra.mxu0 %v937
    %v939 = vand.u32 %v85, 4294901760
    %940 = vmatpush.msra.mxu0 %v939
    %v941 = vand.u32 %v84, 4294901760
    %942 = vmatpush.msra.mxu0 %v941
    %v943 = vand.u32 %v83, 4294901760
    %944 = vmatpush.msra.mxu0 %v943
    %v945 = vand.u32 %v82, 4294901760
    %946 = vmatpush.msra.mxu0 %v945
    %v947 = vand.u32 %v81, 4294901760
    %948 = vmatpush.msra.mxu0 %v947
    %v949 = vand.u32 %v80, 4294901760
    %950 = vmatpush.msra.mxu0 %v949
    %v951 = vand.u32 %v79, 4294901760
    %952 = vmatpush.msra.mxu0 %v951
    %v953 = vand.u32 %v78, 4294901760
    %954 = vmatpush.msra.mxu0 %v953
    %v955 = vand.u32 %v77, 4294901760
    %956 = vmatpush.msra.mxu0 %v955
    %v957 = vand.u32 %v76, 4294901760
    %958 = vmatpush.msra.mxu0 %v957
    %v959 = vand.u32 %v49, 4294901760
    %960 = vmatmul.f32.gmra.mxu0 %v959
    %v961 = vpop.f32.mrf.mxu0
    %v962 = vadd.f32 %v913, %v961
    %v963 = vand.u32 %v52, 4294901760
    %964 = vmatmul.f32.gmra.mxu0 %v963
    %v965 = vpop.f32.mrf.mxu0
    %v966 = vadd.f32 %v917, %v965
    %v967 = vand.u32 %v55, 4294901760
    %968 = vmatmul.f32.gmra.mxu0 %v967
    %v969 = vpop.f32.mrf.mxu0
    %v970 = vadd.f32 %v921, %v969
    %v971 = vand.u32 %v58, 4294901760
    %972 = vmatmul.f32.gmra.mxu0 %v971
    %v973 = vpop.f32.mrf.mxu0
    %v974 = vadd.f32 %v925, %v973
    %975 = vdwg.mxu0
    %v976 = vand.u32 %v107, 4294901760
    %977 = vmatpush.msra.mxu0 %v976
    %v978 = vand.u32 %v106, 4294901760
    %979 = vmatpush.msra.mxu0 %v978
    %v980 = vand.u32 %v105, 4294901760
    %981 = vmatpush.msra.mxu0 %v980
    %v982 = vand.u32 %v104, 4294901760
    %983 = vmatpush.msra.mxu0 %v982
    %v984 = vand.u32 %v103, 4294901760
    %985 = vmatpush.msra.mxu0 %v984
    %v986 = vand.u32 %v102, 4294901760
    %987 = vmatpush.msra.mxu0 %v986
    %v988 = vand.u32 %v101, 4294901760
    %989 = vmatpush.msra.mxu0 %v988
    %v990 = vand.u32 %v100, 4294901760
    %991 = vmatpush.msra.mxu0 %v990
    %v992 = vand.u32 %v99, 4294901760
    %993 = vmatpush.msra.mxu0 %v992
    %v994 = vand.u32 %v98, 4294901760
    %995 = vmatpush.msra.mxu0 %v994
    %v996 = vand.u32 %v97, 4294901760
    %997 = vmatpush.msra.mxu0 %v996
    %v998 = vand.u32 %v96, 4294901760
    %999 = vmatpush.msra.mxu0 %v998
    %v1000 = vand.u32 %v95, 4294901760
    %1001 = vmatpush.msra.mxu0 %v1000
    %v1002 = vand.u32 %v94, 4294901760
    %1003 = vmatpush.msra.mxu0 %v1002
    %v1004 = vand.u32 %v93, 4294901760
    %1005 = vmatpush.msra.mxu0 %v1004
    %v1006 = vand.u32 %v92, 4294901760
    %1007 = vmatpush.msra.mxu0 %v1006
    %v1008 = vand.u32 %v50, 4294901760
    %v1009 = vsub.f32 %v50, %v1008
    %v1010 = vand.u32 %v1009, 4294901760
    %v1011 = vsub.f32 %v1009, %v1010
    %v1012 = vand.u32 %v1011, 4294901760
    %1013 = vmatmul.f32.gmra.mxu0 %v1012
    %v1014 = vpop.f32.mrf.mxu0
    %v1015 = vadd.f32 %v962, %v1014
    %v1016 = vand.u32 %v53, 4294901760
    %v1017 = vsub.f32 %v53, %v1016
    %v1018 = vand.u32 %v1017, 4294901760
    %v1019 = vsub.f32 %v1017, %v1018
    %v1020 = vand.u32 %v1019, 4294901760
    %1021 = vmatmul.f32.gmra.mxu0 %v1020
    %v1022 = vpop.f32.mrf.mxu0
    %v1023 = vadd.f32 %v966, %v1022
    %v1024 = vand.u32 %v56, 4294901760
    %v1025 = vsub.f32 %v56, %v1024
    %v1026 = vand.u32 %v1025, 4294901760
    %v1027 = vsub.f32 %v1025, %v1026
    %v1028 = vand.u32 %v1027, 4294901760
    %1029 = vmatmul.f32.gmra.mxu0 %v1028
    %v1030 = vpop.f32.mrf.mxu0
    %v1031 = vadd.f32 %v970, %v1030
    %v1032 = vand.u32 %v59, 4294901760
    %v1033 = vsub.f32 %v59, %v1032
    %v1034 = vand.u32 %v1033, 4294901760
    %v1035 = vsub.f32 %v1033, %v1034
    %v1036 = vand.u32 %v1035, 4294901760
    %1037 = vmatmul.f32.gmra.mxu0 %v1036
    %v1038 = vpop.f32.mrf.mxu0
    %v1039 = vadd.f32 %v974, %v1038
    %1040 = vdwg.mxu0
    %v1041 = vand.u32 %v107, 4294901760
    %v1042 = vsub.f32 %v107, %v1041
    %v1043 = vand.u32 %v1042, 4294901760
    %v1044 = vsub.f32 %v1042, %v1043
    %v1045 = vand.u32 %v1044, 4294901760
    %1046 = vmatpush.msra.mxu0 %v1045
    %v1047 = vand.u32 %v106, 4294901760
    %v1048 = vsub.f32 %v106, %v1047
    %v1049 = vand.u32 %v1048, 4294901760
    %v1050 = vsub.f32 %v1048, %v1049
    %v1051 = vand.u32 %v1050, 4294901760
    %1052 = vmatpush.msra.mxu0 %v1051
    %v1053 = vand.u32 %v105, 4294901760
    %v1054 = vsub.f32 %v105, %v1053
    %v1055 = vand.u32 %v1054, 4294901760
    %v1056 = vsub.f32 %v1054, %v1055
    %v1057 = vand.u32 %v1056, 4294901760
    %1058 = vmatpush.msra.mxu0 %v1057
    %v1059 = vand.u32 %v104, 4294901760
    %v1060 = vsub.f32 %v104, %v1059
    %v1061 = vand.u32 %v1060, 4294901760
    %v1062 = vsub.f32 %v1060, %v1061
    %v1063 = vand.u32 %v1062, 4294901760
    %1064 = vmatpush.msra.mxu0 %v1063
    %v1065 = vand.u32 %v103, 4294901760
    %v1066 = vsub.f32 %v103, %v1065
    %v1067 = vand.u32 %v1066, 4294901760
    %v1068 = vsub.f32 %v1066, %v1067
    %v1069 = vand.u32 %v1068, 4294901760
    %1070 = vmatpush.msra.mxu0 %v1069
    %v1071 = vand.u32 %v102, 4294901760
    %v1072 = vsub.f32 %v102, %v1071
    %v1073 = vand.u32 %v1072, 4294901760
    %v1074 = vsub.f32 %v1072, %v1073
    %v1075 = vand.u32 %v1074, 4294901760
    %1076 = vmatpush.msra.mxu0 %v1075
    %v1077 = vand.u32 %v101, 4294901760
    %v1078 = vsub.f32 %v101, %v1077
    %v1079 = vand.u32 %v1078, 4294901760
    %v1080 = vsub.f32 %v1078, %v1079
    %v1081 = vand.u32 %v1080, 4294901760
    %1082 = vmatpush.msra.mxu0 %v1081
    %v1083 = vand.u32 %v100, 4294901760
    %v1084 = vsub.f32 %v100, %v1083
    %v1085 = vand.u32 %v1084, 4294901760
    %v1086 = vsub.f32 %v1084, %v1085
    %v1087 = vand.u32 %v1086, 4294901760
    %1088 = vmatpush.msra.mxu0 %v1087
    %v1089 = vand.u32 %v99, 4294901760
    %v1090 = vsub.f32 %v99, %v1089
    %v1091 = vand.u32 %v1090, 4294901760
    %v1092 = vsub.f32 %v1090, %v1091
    %v1093 = vand.u32 %v1092, 4294901760
    %1094 = vmatpush.msra.mxu0 %v1093
    %v1095 = vand.u32 %v98, 4294901760
    %v1096 = vsub.f32 %v98, %v1095
    %v1097 = vand.u32 %v1096, 4294901760
    %v1098 = vsub.f32 %v1096, %v1097
    %v1099 = vand.u32 %v1098, 4294901760
    %1100 = vmatpush.msra.mxu0 %v1099
    %v1101 = vand.u32 %v97, 4294901760
    %v1102 = vsub.f32 %v97, %v1101
    %v1103 = vand.u32 %v1102, 4294901760
    %v1104 = vsub.f32 %v1102, %v1103
    %v1105 = vand.u32 %v1104, 4294901760
    %1106 = vmatpush.msra.mxu0 %v1105
    %v1107 = vand.u32 %v96, 4294901760
    %v1108 = vsub.f32 %v96, %v1107
    %v1109 = vand.u32 %v1108, 4294901760
    %v1110 = vsub.f32 %v1108, %v1109
    %v1111 = vand.u32 %v1110, 4294901760
    %1112 = vmatpush.msra.mxu0 %v1111
    %v1113 = vand.u32 %v95, 4294901760
    %v1114 = vsub.f32 %v95, %v1113
    %v1115 = vand.u32 %v1114, 4294901760
    %v1116 = vsub.f32 %v1114, %v1115
    %v1117 = vand.u32 %v1116, 4294901760
    %1118 = vmatpush.msra.mxu0 %v1117
    %v1119 = vand.u32 %v94, 4294901760
    %v1120 = vsub.f32 %v94, %v1119
    %v1121 = vand.u32 %v1120, 4294901760
    %v1122 = vsub.f32 %v1120, %v1121
    %v1123 = vand.u32 %v1122, 4294901760
    %1124 = vmatpush.msra.mxu0 %v1123
    %v1125 = vand.u32 %v93, 4294901760
    %v1126 = vsub.f32 %v93, %v1125
    %v1127 = vand.u32 %v1126, 4294901760
    %v1128 = vsub.f32 %v1126, %v1127
    %v1129 = vand.u32 %v1128, 4294901760
    %1130 = vmatpush.msra.mxu0 %v1129
    %v1131 = vand.u32 %v92, 4294901760
    %v1132 = vsub.f32 %v92, %v1131
    %v1133 = vand.u32 %v1132, 4294901760
    %v1134 = vsub.f32 %v1132, %v1133
    %v1135 = vand.u32 %v1134, 4294901760
    %1136 = vmatpush.msra.mxu0 %v1135
    %v1137 = vand.u32 %v50, 4294901760
    %1138 = vmatmul.f32.gmra.mxu0 %v1137
    %v1139 = vpop.f32.mrf.mxu0
    %v1140 = vadd.f32 %v1015, %v1139
    %v1141 = vand.u32 %v53, 4294901760
    %1142 = vmatmul.f32.gmra.mxu0 %v1141
    %v1143 = vpop.f32.mrf.mxu0
    %v1144 = vadd.f32 %v1023, %v1143
    %v1145 = vand.u32 %v56, 4294901760
    %1146 = vmatmul.f32.gmra.mxu0 %v1145
    %v1147 = vpop.f32.mrf.mxu0
    %v1148 = vadd.f32 %v1031, %v1147
    %v1149 = vand.u32 %v59, 4294901760
    %1150 = vmatmul.f32.gmra.mxu0 %v1149
    %v1151 = vpop.f32.mrf.mxu0
    %v1152 = vadd.f32 %v1039, %v1151
    %1153 = vdwg.mxu0
    %v1154 = vand.u32 %v107, 4294901760
    %v1155 = vsub.f32 %v107, %v1154
    %1156 = vmatpush.msra.mxu0 %v1155
    %v1157 = vand.u32 %v106, 4294901760
    %v1158 = vsub.f32 %v106, %v1157
    %1159 = vmatpush.msra.mxu0 %v1158
    %v1160 = vand.u32 %v105, 4294901760
    %v1161 = vsub.f32 %v105, %v1160
    %1162 = vmatpush.msra.mxu0 %v1161
    %v1163 = vand.u32 %v104, 4294901760
    %v1164 = vsub.f32 %v104, %v1163
    %1165 = vmatpush.msra.mxu0 %v1164
    %v1166 = vand.u32 %v103, 4294901760
    %v1167 = vsub.f32 %v103, %v1166
    %1168 = vmatpush.msra.mxu0 %v1167
    %v1169 = vand.u32 %v102, 4294901760
    %v1170 = vsub.f32 %v102, %v1169
    %1171 = vmatpush.msra.mxu0 %v1170
    %v1172 = vand.u32 %v101, 4294901760
    %v1173 = vsub.f32 %v101, %v1172
    %1174 = vmatpush.msra.mxu0 %v1173
    %v1175 = vand.u32 %v100, 4294901760
    %v1176 = vsub.f32 %v100, %v1175
    %1177 = vmatpush.msra.mxu0 %v1176
    %v1178 = vand.u32 %v99, 4294901760
    %v1179 = vsub.f32 %v99, %v1178
    %1180 = vmatpush.msra.mxu0 %v1179
    %v1181 = vand.u32 %v98, 4294901760
    %v1182 = vsub.f32 %v98, %v1181
    %1183 = vmatpush.msra.mxu0 %v1182
    %v1184 = vand.u32 %v97, 4294901760
    %v1185 = vsub.f32 %v97, %v1184
    %1186 = vmatpush.msra.mxu0 %v1185
    %v1187 = vand.u32 %v96, 4294901760
    %v1188 = vsub.f32 %v96, %v1187
    %1189 = vmatpush.msra.mxu0 %v1188
    %v1190 = vand.u32 %v95, 4294901760
    %v1191 = vsub.f32 %v95, %v1190
    %1192 = vmatpush.msra.mxu0 %v1191
    %v1193 = vand.u32 %v94, 4294901760
    %v1194 = vsub.f32 %v94, %v1193
    %1195 = vmatpush.msra.mxu0 %v1194
    %v1196 = vand.u32 %v93, 4294901760
    %v1197 = vsub.f32 %v93, %v1196
    %1198 = vmatpush.msra.mxu0 %v1197
    %v1199 = vand.u32 %v92, 4294901760
    %v1200 = vsub.f32 %v92, %v1199
    %1201 = vmatpush.msra.mxu0 %v1200
    %v1202 = vand.u32 %v50, 4294901760
    %v1203 = vsub.f32 %v50, %v1202
    %1204 = vmatmul.f32.gmra.mxu0 %v1203
    %v1205 = vpop.f32.mrf.mxu0
    %v1206 = vadd.f32 %v1140, %v1205
    %v1207 = vand.u32 %v53, 4294901760
    %v1208 = vsub.f32 %v53, %v1207
    %1209 = vmatmul.f32.gmra.mxu0 %v1208
    %v1210 = vpop.f32.mrf.mxu0
    %v1211 = vadd.f32 %v1144, %v1210
    %v1212 = vand.u32 %v56, 4294901760
    %v1213 = vsub.f32 %v56, %v1212
    %1214 = vmatmul.f32.gmra.mxu0 %v1213
    %v1215 = vpop.f32.mrf.mxu0
    %v1216 = vadd.f32 %v1148, %v1215
    %v1217 = vand.u32 %v59, 4294901760
    %v1218 = vsub.f32 %v59, %v1217
    %1219 = vmatmul.f32.gmra.mxu0 %v1218
    %v1220 = vpop.f32.mrf.mxu0
    %v1221 = vadd.f32 %v1152, %v1220
    %1222 = vdwg.mxu0
    %v1223 = vand.u32 %v107, 4294901760
    %1224 = vmatpush.msra.mxu0 %v1223
    %v1225 = vand.u32 %v106, 4294901760
    %1226 = vmatpush.msra.mxu0 %v1225
    %v1227 = vand.u32 %v105, 4294901760
    %1228 = vmatpush.msra.mxu0 %v1227
    %v1229 = vand.u32 %v104, 4294901760
    %1230 = vmatpush.msra.mxu0 %v1229
    %v1231 = vand.u32 %v103, 4294901760
    %1232 = vmatpush.msra.mxu0 %v1231
    %v1233 = vand.u32 %v102, 4294901760
    %1234 = vmatpush.msra.mxu0 %v1233
    %v1235 = vand.u32 %v101, 4294901760
    %1236 = vmatpush.msra.mxu0 %v1235
    %v1237 = vand.u32 %v100, 4294901760
    %1238 = vmatpush.msra.mxu0 %v1237
    %v1239 = vand.u32 %v99, 4294901760
    %1240 = vmatpush.msra.mxu0 %v1239
    %v1241 = vand.u32 %v98, 4294901760
    %1242 = vmatpush.msra.mxu0 %v1241
    %v1243 = vand.u32 %v97, 4294901760
    %1244 = vmatpush.msra.mxu0 %v1243
    %v1245 = vand.u32 %v96, 4294901760
    %1246 = vmatpush.msra.mxu0 %v1245
    %v1247 = vand.u32 %v95, 4294901760
    %1248 = vmatpush.msra.mxu0 %v1247
    %v1249 = vand.u32 %v94, 4294901760
    %1250 = vmatpush.msra.mxu0 %v1249
    %v1251 = vand.u32 %v93, 4294901760
    %1252 = vmatpush.msra.mxu0 %v1251
    %v1253 = vand.u32 %v92, 4294901760
    %1254 = vmatpush.msra.mxu0 %v1253
    %v1255 = vand.u32 %v50, 4294901760
    %v1256 = vsub.f32 %v50, %v1255
    %v1257 = vand.u32 %v1256, 4294901760
    %1258 = vmatmul.f32.gmra.mxu0 %v1257
    %v1259 = vpop.f32.mrf.mxu0
    %v1260 = vadd.f32 %v1206, %v1259
    %v1261 = vand.u32 %v53, 4294901760
    %v1262 = vsub.f32 %v53, %v1261
    %v1263 = vand.u32 %v1262, 4294901760
    %1264 = vmatmul.f32.gmra.mxu0 %v1263
    %v1265 = vpop.f32.mrf.mxu0
    %v1266 = vadd.f32 %v1211, %v1265
    %v1267 = vand.u32 %v56, 4294901760
    %v1268 = vsub.f32 %v56, %v1267
    %v1269 = vand.u32 %v1268, 4294901760
    %1270 = vmatmul.f32.gmra.mxu0 %v1269
    %v1271 = vpop.f32.mrf.mxu0
    %v1272 = vadd.f32 %v1216, %v1271
    %v1273 = vand.u32 %v59, 4294901760
    %v1274 = vsub.f32 %v59, %v1273
    %v1275 = vand.u32 %v1274, 4294901760
    %1276 = vmatmul.f32.gmra.mxu0 %v1275
    %v1277 = vpop.f32.mrf.mxu0
    %v1278 = vadd.f32 %v1221, %v1277
    %1279 = vdwg.mxu0
    %v1280 = vand.u32 %v107, 4294901760
    %v1281 = vsub.f32 %v107, %v1280
    %v1282 = vand.u32 %v1281, 4294901760
    %1283 = vmatpush.msra.mxu0 %v1282
    %v1284 = vand.u32 %v106, 4294901760
    %v1285 = vsub.f32 %v106, %v1284
    %v1286 = vand.u32 %v1285, 4294901760
    %1287 = vmatpush.msra.mxu0 %v1286
    %v1288 = vand.u32 %v105, 4294901760
    %v1289 = vsub.f32 %v105, %v1288
    %v1290 = vand.u32 %v1289, 4294901760
    %1291 = vmatpush.msra.mxu0 %v1290
    %v1292 = vand.u32 %v104, 4294901760
    %v1293 = vsub.f32 %v104, %v1292
    %v1294 = vand.u32 %v1293, 4294901760
    %1295 = vmatpush.msra.mxu0 %v1294
    %v1296 = vand.u32 %v103, 4294901760
    %v1297 = vsub.f32 %v103, %v1296
    %v1298 = vand.u32 %v1297, 4294901760
    %1299 = vmatpush.msra.mxu0 %v1298
    %v1300 = vand.u32 %v102, 4294901760
    %v1301 = vsub.f32 %v102, %v1300
    %v1302 = vand.u32 %v1301, 4294901760
    %1303 = vmatpush.msra.mxu0 %v1302
    %v1304 = vand.u32 %v101, 4294901760
    %v1305 = vsub.f32 %v101, %v1304
    %v1306 = vand.u32 %v1305, 4294901760
    %1307 = vmatpush.msra.mxu0 %v1306
    %v1308 = vand.u32 %v100, 4294901760
    %v1309 = vsub.f32 %v100, %v1308
    %v1310 = vand.u32 %v1309, 4294901760
    %1311 = vmatpush.msra.mxu0 %v1310
    %v1312 = vand.u32 %v99, 4294901760
    %v1313 = vsub.f32 %v99, %v1312
    %v1314 = vand.u32 %v1313, 4294901760
    %1315 = vmatpush.msra.mxu0 %v1314
    %v1316 = vand.u32 %v98, 4294901760
    %v1317 = vsub.f32 %v98, %v1316
    %v1318 = vand.u32 %v1317, 4294901760
    %1319 = vmatpush.msra.mxu0 %v1318
    %v1320 = vand.u32 %v97, 4294901760
    %v1321 = vsub.f32 %v97, %v1320
    %v1322 = vand.u32 %v1321, 4294901760
    %1323 = vmatpush.msra.mxu0 %v1322
    %v1324 = vand.u32 %v96, 4294901760
    %v1325 = vsub.f32 %v96, %v1324
    %v1326 = vand.u32 %v1325, 4294901760
    %1327 = vmatpush.msra.mxu0 %v1326
    %v1328 = vand.u32 %v95, 4294901760
    %v1329 = vsub.f32 %v95, %v1328
    %v1330 = vand.u32 %v1329, 4294901760
    %1331 = vmatpush.msra.mxu0 %v1330
    %v1332 = vand.u32 %v94, 4294901760
    %v1333 = vsub.f32 %v94, %v1332
    %v1334 = vand.u32 %v1333, 4294901760
    %1335 = vmatpush.msra.mxu0 %v1334
    %v1336 = vand.u32 %v93, 4294901760
    %v1337 = vsub.f32 %v93, %v1336
    %v1338 = vand.u32 %v1337, 4294901760
    %1339 = vmatpush.msra.mxu0 %v1338
    %v1340 = vand.u32 %v92, 4294901760
    %v1341 = vsub.f32 %v92, %v1340
    %v1342 = vand.u32 %v1341, 4294901760
    %1343 = vmatpush.msra.mxu0 %v1342
    %v1344 = vand.u32 %v50, 4294901760
    %1345 = vmatmul.f32.gmra.mxu0 %v1344
    %v1346 = vpop.f32.mrf.mxu0
    %v1347 = vadd.f32 %v1260, %v1346
    %v1348 = vand.u32 %v53, 4294901760
    %1349 = vmatmul.f32.gmra.mxu0 %v1348
    %v1350 = vpop.f32.mrf.mxu0
    %v1351 = vadd.f32 %v1266, %v1350
    %v1352 = vand.u32 %v56, 4294901760
    %1353 = vmatmul.f32.gmra.mxu0 %v1352
    %v1354 = vpop.f32.mrf.mxu0
    %v1355 = vadd.f32 %v1272, %v1354
    %v1356 = vand.u32 %v59, 4294901760
    %1357 = vmatmul.f32.gmra.mxu0 %v1356
    %v1358 = vpop.f32.mrf.mxu0
    %v1359 = vadd.f32 %v1278, %v1358
    %1360 = vdwg.mxu0
    %v1361 = vand.u32 %v107, 4294901760
    %1362 = vmatpush.msra.mxu0 %v1361
    %v1363 = vand.u32 %v106, 4294901760
    %1364 = vmatpush.msra.mxu0 %v1363
    %v1365 = vand.u32 %v105, 4294901760
    %1366 = vmatpush.msra.mxu0 %v1365
    %v1367 = vand.u32 %v104, 4294901760
    %1368 = vmatpush.msra.mxu0 %v1367
    %v1369 = vand.u32 %v103, 4294901760
    %1370 = vmatpush.msra.mxu0 %v1369
    %v1371 = vand.u32 %v102, 4294901760
    %1372 = vmatpush.msra.mxu0 %v1371
    %v1373 = vand.u32 %v101, 4294901760
    %1374 = vmatpush.msra.mxu0 %v1373
    %v1375 = vand.u32 %v100, 4294901760
    %1376 = vmatpush.msra.mxu0 %v1375
    %v1377 = vand.u32 %v99, 4294901760
    %1378 = vmatpush.msra.mxu0 %v1377
    %v1379 = vand.u32 %v98, 4294901760
    %1380 = vmatpush.msra.mxu0 %v1379
    %v1381 = vand.u32 %v97, 4294901760
    %1382 = vmatpush.msra.mxu0 %v1381
    %v1383 = vand.u32 %v96, 4294901760
    %1384 = vmatpush.msra.mxu0 %v1383
    %v1385 = vand.u32 %v95, 4294901760
    %1386 = vmatpush.msra.mxu0 %v1385
    %v1387 = vand.u32 %v94, 4294901760
    %1388 = vmatpush.msra.mxu0 %v1387
    %v1389 = vand.u32 %v93, 4294901760
    %1390 = vmatpush.msra.mxu0 %v1389
    %v1391 = vand.u32 %v92, 4294901760
    %1392 = vmatpush.msra.mxu0 %v1391
    %v1393 = vand.u32 %v50, 4294901760
    %1394 = vmatmul.f32.gmra.mxu0 %v1393
    %v1395 = vpop.f32.mrf.mxu0
    %v1396 = vadd.f32 %v1347, %v1395
    %v1397 = vand.u32 %v53, 4294901760
    %1398 = vmatmul.f32.gmra.mxu0 %v1397
    %v1399 = vpop.f32.mrf.mxu0
    %v1400 = vadd.f32 %v1351, %v1399
    %v1401 = vand.u32 %v56, 4294901760
    %1402 = vmatmul.f32.gmra.mxu0 %v1401
    %v1403 = vpop.f32.mrf.mxu0
    %v1404 = vadd.f32 %v1355, %v1403
    %v1405 = vand.u32 %v59, 4294901760
    %1406 = vmatmul.f32.gmra.mxu0 %v1405
    %v1407 = vpop.f32.mrf.mxu0
    %v1408 = vadd.f32 %v1359, %v1407
    %1409 = vdwg.mxu0
    %s1410 = sld [smem:[#allocation2]]
    %v1411 = vstv %s1410
    %v1412 = vsub.f32 %v1396, %v1411
    %v1413 = vsub.f32 %v1400, %v1411
    %v1414 = vsub.f32 %v1404, %v1411
    %v1415 = vsub.f32 %v1408, %v1411
    %1416 = vst [vmem:[#allocation8] sm:$0xff] %v1412
    %1417 = vst [vmem:[#allocation8 + $0x8] sm:$0xff] %v1413
    %1418 = vst [vmem:[#allocation8 + $0x10] sm:$0xff] %v1414
    %1419 = vst [vmem:[#allocation8 + $0x18] sm:$0xff] %v1415
    // Predicated region
    $region22: #{tpu_custom_call.1} parent=1 // pred_check
      _
    $region23: #{tpu_custom_call.1} parent=1 // pred_check_branch
      %1421 = sbr.rel (0) target = $region25
    $region24: #{tpu_custom_call.1} parent=1 // pred_region
      %1423 = vsyncadd [#allocation5], 0
      %s1424 = sshll.u32 [#allocation8], 4
      %s1425 = int_to_ptr.vmem [resolvable:$true] %s1424
      %s1426 = sshll.u32 %s3, 4
      %s1427 = int_to_ptr.hbm [resolvable:$true] %s1426
      %1432 = dma.vmem_to_hbm [thread:$0]  %s1425, 512, %s1427, [#allocation5], 128, 128, 8
    $region25: #{tpu_custom_call.1} parent=1 // pred_fallthru
      _
    // Predicated region
    $region26: #{tpu_custom_call.1} parent=1 // pred_check
      _
    $region27: #{tpu_custom_call.1} parent=1 // pred_check_branch
      %1434 = sbr.rel (0) target = $region29
    $region28: #{tpu_custom_call.1} parent=1 // pred_region
      %1436 = dma.done [#allocation5], 512
    $region29: #{tpu_custom_call.1} parent=1 // pred_fallthru
      _
    %1437 = vsyncpa [#allocation4], 1
    %1438 = vsyncpa [#allocation7], 1
    %1439 = vsyncpa [#allocation5], 1

</llo_original>
